<compile_context>
chip_gen: v5e
topology: v5e:2x2
jax: 0.10.0
libtpu: 0.0.40
codegen_flags: <defaults>
</compile_context>

<pallas_src>
import functools
import math

import jax
import jax.numpy as jnp
from jax import lax
from jax.experimental import pallas as pl
from jax.experimental.pallas import tpu as pltpu


# Safe on v5e/v6e/v7x; raise toward 64-96 MiB on v6e when using larger tiles.
_VMEM_LIMIT = 32 * 1024 * 1024


def _pick_tile(dim, cap):
    """Largest tile <= cap that divides dim (falls back to the full dim)."""
    if dim <= cap:
        return dim
    t = cap
    while t >= 8:
        if dim % t == 0:
            return t
        t //= 2
    return dim


# ----------------------------------------------------------------------------
# Kernel 1: tiled linear  y = x @ W_t + b,  W_t pre-transposed to (K, N), bf16.
# ----------------------------------------------------------------------------
def _linear_kernel(x_ref, wt_ref, b_ref, o_ref, acc_ref):
    @pl.when(pl.program_id(2) == 0)
    def _init():
        acc_ref[...] = jnp.zeros_like(acc_ref)

    acc_ref[...] += jnp.dot(
        x_ref[...].astype(jnp.bfloat16),        # bf16 MXU inputs
        wt_ref[...].astype(jnp.bfloat16),
        preferred_element_type=jnp.float32,     # fp32 accumulation
    )

    @pl.when(pl.program_id(2) == pl.num_programs(2) - 1)
    def _finalize():
        o_ref[...] = (acc_ref[...] + b_ref[...]).astype(o_ref.dtype)


def linear(x, wt, b, out_dtype=jnp.float32, tm_cap=256, tn_cap=256, tk_cap=512):
    M, K = x.shape
    Kw, N = wt.shape
    assert K == Kw
    tm = _pick_tile(M, tm_cap)
    tn = _pick_tile(N, tn_cap)
    tk = _pick_tile(K, tk_cap)
    grid = (M // tm, N // tn, K // tk)
    return pl.pallas_call(
        _linear_kernel,
        out_shape=jax.ShapeDtypeStruct((M, N), out_dtype),
        grid=grid,
        in_specs=[
            pl.BlockSpec((tm, tk), lambda i, j, k: (i, k)),
            pl.BlockSpec((tk, tn), lambda i, j, k: (k, j)),
            pl.BlockSpec((1, tn), lambda i, j, k: (0, j)),
        ],
        out_specs=pl.BlockSpec((tm, tn), lambda i, j, k: (i, j)),
        scratch_shapes=[pltpu.VMEM((tm, tn), jnp.float32)],
        compiler_params=pltpu.CompilerParams(
            dimension_semantics=("parallel", "parallel", "arbitrary"),
            vmem_limit_bytes=_VMEM_LIMIT,
        ),
    )(x, wt, b)


# ----------------------------------------------------------------------------
# Kernel 2: attention core.  One program handles all H heads of one
# (batch, q-tile): scores = q k^T (NT dot_general), softmax (fp32),
# probs @ v, lane-dense (tq, E) output store, in-kernel head-mean weights.
# ----------------------------------------------------------------------------
def _attention_kernel(qkv_q_ref, qkv_kv_ref, o_ref, w_ref, *,
                      num_heads, head_dim, embed_dim):
    H, hd, E = num_heads, head_dim, embed_dim
    tq = o_ref.shape[1]
    S = qkv_kv_ref.shape[1]

    w_acc = jnp.zeros((tq, S), jnp.float32)
    out_heads = []
    for h in range(H):  # static unrolled loop; static slices are free ref views
        q = qkv_q_ref[0, :, h * hd:(h + 1) * hd]                       # (tq, hd) bf16, pre-scaled
        k = qkv_kv_ref[0, :, E + h * hd:E + (h + 1) * hd]              # (S, hd) bf16
        v = qkv_kv_ref[0, :, 2 * E + h * hd:2 * E + (h + 1) * hd]      # (S, hd) bf16

        # scores = q @ k^T with NO in-kernel transpose (contract last dims, NT form)
        s = lax.dot_general(q, k, (((1,), (1,)), ((), ())),
                            preferred_element_type=jnp.float32)        # (tq, S) fp32

        m = jnp.max(s, axis=-1, keepdims=True)
        e = jnp.exp(s - m)
        denom = jnp.sum(e, axis=-1, keepdims=True)
        p = e * pl.reciprocal(denom, approx=True)                      # fp32 probabilities
        w_acc = w_acc + p

        out_heads.append(
            jnp.dot(p.astype(jnp.bfloat16), v, preferred_element_type=jnp.float32)
        )

    # One lane-dense (tq, E) store instead of H narrow (tq, hd) stores.
    o_ref[0] = jnp.concatenate(out_heads, axis=-1).astype(o_ref.dtype)
    # Head-averaged weights accumulated in-kernel: avoids the (B*H, T, S) fp32 HBM stream.
    w_ref[0] = w_acc * (1.0 / H)


def attention(qkv, num_heads, head_dim, tq_cap=256):
    B, T, threeE = qkv.shape
    E = threeE // 3
    tq = _pick_tile(T, tq_cap)
    grid = (B, T // tq)
    kernel = functools.partial(_attention_kernel, num_heads=num_heads,
                               head_dim=head_dim, embed_dim=E)
    return pl.pallas_call(
        kernel,
        out_shape=(
            jax.ShapeDtypeStruct((B, T, E), jnp.bfloat16),   # attn (pre out-proj)
            jax.ShapeDtypeStruct((B, T, T), jnp.float32),    # head-averaged weights
        ),
        grid=grid,
        in_specs=[
            # q rows for this q-tile (same qkv array passed twice with different specs)
            pl.BlockSpec((1, tq, threeE), lambda b, qi: (b, qi, 0)),
            # full k/v rows for this batch
            pl.BlockSpec((1, T, threeE), lambda b, qi: (b, 0, 0)),
        ],
        out_specs=(
            pl.BlockSpec((1, tq, E), lambda b, qi: (b, qi, 0)),
            pl.BlockSpec((1, tq, T), lambda b, qi: (b, qi, 0)),
        ),
        compiler_params=pltpu.CompilerParams(
            dimension_semantics=("parallel", "parallel"),
            vmem_limit_bytes=_VMEM_LIMIT,
        ),
    )(qkv, qkv)


# ----------------------------------------------------------------------------
# Parameter preparation: fold q-scaling, pre-transpose weights, cast to bf16.
# ----------------------------------------------------------------------------
def prepare_params(params, num_heads):
    E = params["out_proj_weight"].shape[0]
    hd = E // num_heads
    scaling = hd ** (-0.5)
    in_w = params["in_proj_weight"].astype(jnp.float32)
    in_b = params["in_proj_bias"].astype(jnp.float32)
    # fold `q *= scaling` into the q rows of the in-projection (zero runtime cost)
    in_w = in_w.at[:E].multiply(scaling)
    in_b = in_b.at[:E].multiply(scaling)
    out_w = params["out_proj_weight"].astype(jnp.float32)
    out_b = params["out_proj_bias"].astype(jnp.float32)
    return {
        "in_wt": in_w.T.astype(jnp.bfloat16),     # (E, 3E)   bf16, already (K, N)
        "in_b": in_b.reshape(1, -1),              # (1, 3E)   fp32
        "out_wt": out_w.T.astype(jnp.bfloat16),   # (E, E)    bf16
        "out_b": out_b.reshape(1, -1),            # (1, E)    fp32
    }


# ----------------------------------------------------------------------------
# Full forward pass (self-attention path of the PyTorch module)
# ----------------------------------------------------------------------------
def multihead_attention_forward(query, params, num_heads):
    """query: (T, B, E) fp32. Returns (attn (T,B,E) fp32, attn_weights (B,T,S) fp32)."""
    T, B, E = query.shape
    H = num_heads
    hd = E // H
    prepped = prepare_params(params, H)

    # Batch-major internal layout: each head becomes a contiguous last-dim span,
    # so no per-q/k/v head-split transposes are needed (one transpose in, one out).
    x = query.transpose(1, 0, 2).reshape(B * T, E)

    qkv = linear(x, prepped["in_wt"], prepped["in_b"], out_dtype=jnp.bfloat16)
    qkv = qkv.reshape(B, T, 3 * E)

    attn_btE, attn_weights = attention(qkv, H, hd)

    attn = linear(attn_btE.reshape(B * T, E), prepped["out_wt"], prepped["out_b"],
                  out_dtype=jnp.float32)
    attn = attn.reshape(B, T, E).transpose(1, 0, 2)

    # TODO(synk): key_padding_mask / attn_mask / attn_bias / incremental_state /
    # add_bias_kv / add_zero_attn / dropout paths are unused defaults and not implemented.
    return attn, attn_weights


# ----------------------------------------------------------------------------
# Deterministic parameter init (mirrors reset_parameters shapes/semantics)
# ----------------------------------------------------------------------------
def xavier_uniform(key, shape):
    fan_out, fan_in = shape
    bound = math.sqrt(6.0 / (fan_in + fan_out))
    return jax.random.uniform(key, shape, jnp.float32, -bound, bound)


def init_params(key, embed_dim):
    k1, k2 = jax.random.split(key)
    return {
        "in_proj_weight": xavier_uniform(k1, (3 * embed_dim, embed_dim)),
        "in_proj_bias": jnp.zeros((3 * embed_dim,), jnp.float32),
        "out_proj_weight": xavier_uniform(k2, (embed_dim, embed_dim)),
        "out_proj_bias": jnp.zeros((embed_dim,), jnp.float32),
    }


# ----------------------------------------------------------------------------
# Pure-JAX references.  match_bf16=True mirrors the kernels' bf16-matmul /
# fp32-accumulate dtype strategy so the comparison isolates kernel logic;
# match_bf16=False is the exact fp32 module semantics (loose sanity check).
# ----------------------------------------------------------------------------
def reference_forward(query, params, num_heads, match_bf16=True):
    T, B, E = query.shape
    H = num_heads
    hd = E // H
    scaling = hd ** (-0.5)
    in_w = params["in_proj_weight"].at[:E].multiply(scaling)
    in_b = params["in_proj_bias"].at[:E].multiply(scaling)
    out_w = params["out_proj_weight"]
    out_b = params["out_proj_bias"]

    cast = (lambda t: t.astype(jnp.bfloat16)) if match_bf16 else (lambda t: t)

    x = query.transpose(1, 0, 2)                                    # (B, T, E)
    qkv = jnp.einsum("bte,ef->btf", cast(x), cast(in_w.T),
                     preferred_element_type=jnp.float32) + in_b
    qkv = cast(qkv)
    q, k, v = jnp.split(qkv, 3, axis=-1)

    def split_heads(t):
        return t.reshape(B, T, H, hd).transpose(0, 2, 1, 3)         # (B, H, T, hd)

    qh, kh, vh = split_heads(q), split_heads(k), split_heads(v)
    s = jnp.einsum("bhtd,bhsd->bhts", qh, kh, preferred_element_type=jnp.float32)
    p = jax.nn.softmax(s, axis=-1)
    attn = jnp.einsum("bhts,bhsd->bhtd", cast(p), vh,
                      preferred_element_type=jnp.float32)
    attn = cast(attn.transpose(0, 2, 1, 3).reshape(B, T, E))
    out = jnp.einsum("bte,ef->btf", attn, cast(out_w.T),
                     preferred_element_type=jnp.float32) + out_b
    out = out.transpose(1, 0, 2).astype(jnp.float32)                # (T, B, E)
    w = p.mean(axis=1)                                              # (B, T, S)
    return out, w


if __name__ == "__main__":
    # Small shapes consistent with the module: seq=8, batch=2, embed_dim=32, heads=4
    T, B, E, H = 8, 2, 32, 4

    key = jax.random.PRNGKey(0)
    kp, kq = jax.random.split(key)
    params = init_params(kp, E)
    query = jax.random.normal(kq, (T, B, E), jnp.float32)

    attn, attn_weights = multihead_attention_forward(query, params, H)
    attn = jax.block_until_ready(attn)
    attn_weights = jax.block_until_ready(attn_weights)

    assert attn.shape == (T, B, E)
    assert attn_weights.shape == (B, T, T)

    # Matched-precision reference (same bf16 matmul inputs / fp32 accumulation).
    ref_attn, ref_w = reference_forward(query, params, H, match_bf16=True)
    assert jnp.allclose(attn, ref_attn, atol=2e-2, rtol=2e-2)
    assert jnp.allclose(attn_weights, ref_w, atol=2e-2, rtol=2e-2)

    # Loose sanity check against the exact fp32 module semantics.
    ref_attn32, ref_w32 = reference_forward(query, params, H, match_bf16=False)
    assert jnp.allclose(attn, ref_attn32, atol=1e-1, rtol=1e-1)
    assert jnp.allclose(attn_weights, ref_w32, atol=5e-2, rtol=5e-2)

    # Head-averaged softmax rows must sum to ~1.
    assert jnp.allclose(attn_weights.sum(axis=-1), 1.0, atol=5e-3)

    print("KERNEL_OK")
</pallas_src>

<mosaic_0001>
module attributes {stable_mosaic.version = 11 : i64} {
  func.func @_linear_kernel(%arg0: i32, %arg1: i32, %arg2: i32, %arg3: memref<16x32xf32, #tpu.memory_space<vmem>>, %arg4: memref<32x96xbf16, #tpu.memory_space<vmem>>, %arg5: memref<1x96xf32, #tpu.memory_space<vmem>>, %arg6: memref<16x96xbf16, #tpu.memory_space<vmem>>, %arg7: memref<16x96xf32, #tpu.memory_space<vmem>>) attributes {dimension_semantics = [#tpu.dimension_semantics<parallel>, #tpu.dimension_semantics<parallel>, #tpu.dimension_semantics<arbitrary>], iteration_bounds = array<i64: 1, 1, 1>, scalar_prefetch = 0 : i64, scratch_operands = 1 : i64, tpu.core_type = #tpu.core_type<tc>, window_params = [{transform_indices = @transform_0, window_bounds = array<i64: 16, 32>}, {transform_indices = @transform_1, window_bounds = array<i64: 32, 96>}, {transform_indices = @transform_2, window_bounds = array<i64: 1, 96>}, {transform_indices = @transform_3, window_bounds = array<i64: 16, 96>}]} {
    %c0_i32 = arith.constant 0 : i32
    %0 = arith.cmpi eq, %arg2, %c0_i32 : i32
    %1 = arith.extui %0 : i1 to i32
    %c0_i32_0 = arith.constant 0 : i32
    %2 = arith.cmpi ne, %1, %c0_i32_0 : i32
    scf.if %2 {
      %cst_10 = arith.constant 0.000000e+00 : f32
      %13 = vector.broadcast %cst_10 : f32 to vector<16x96xf32>
      %c0_11 = arith.constant 0 : index
      %c0_12 = arith.constant 0 : index
      %14 = vector.load %arg7[%c0_11, %c0_12] : memref<16x96xf32, #tpu.memory_space<vmem>>, vector<16x96xf32>
      tpu.vector_store %arg7[%c0_11, %c0_12], %13 {strides = array<i32>} : memref<16x96xf32, #tpu.memory_space<vmem>>, vector<16x96xf32>,
    } else {
    }
    %c0 = arith.constant 0 : index
    %c0_1 = arith.constant 0 : index
    %3 = vector.load %arg7[%c0, %c0_1] : memref<16x96xf32, #tpu.memory_space<vmem>>, vector<16x96xf32>
    %c0_2 = arith.constant 0 : index
    %c0_3 = arith.constant 0 : index
    %4 = vector.load %arg3[%c0_2, %c0_3] : memref<16x32xf32, #tpu.memory_space<vmem>>, vector<16x32xf32>
    %5 = arith.truncf %4 : vector<16x32xf32> to vector<16x32xbf16>
    %c0_4 = arith.constant 0 : index
    %c0_5 = arith.constant 0 : index
    %6 = vector.load %arg4[%c0_4, %c0_5] : memref<32x96xbf16, #tpu.memory_space<vmem>>, vector<32x96xbf16>
    %cst = arith.constant dense<0.000000e+00> : vector<16x96xf32>
    %7 = tpu.matmul %5, %6, %cst {dimension_numbers = #tpu.dot_dimension_numbers<[1], [0], [0], [1], [0, 0, 1, 1], [], []>} : vector<16x32xbf16>, vector<32x96xbf16>, vector<16x96xf32> -> vector<16x96xf32>
    %8 = arith.addf %3, %7 : vector<16x96xf32>
    %c0_6 = arith.constant 0 : index
    %c0_7 = arith.constant 0 : index
    %9 = vector.load %arg7[%c0_6, %c0_7] : memref<16x96xf32, #tpu.memory_space<vmem>>, vector<16x96xf32>
    tpu.vector_store %arg7[%c0_6, %c0_7], %8 {strides = array<i32>} : memref<16x96xf32, #tpu.memory_space<vmem>>, vector<16x96xf32>,
    %c0_i32_8 = arith.constant 0 : i32
    %10 = arith.cmpi eq, %arg2, %c0_i32_8 : i32
    %11 = arith.extui %10 : i1 to i32
    %c0_i32_9 = arith.constant 0 : i32
    %12 = arith.cmpi ne, %11, %c0_i32_9 : i32
    scf.if %12 {
      %c0_10 = arith.constant 0 : index
      %c0_11 = arith.constant 0 : index
      %13 = vector.load %arg7[%c0_10, %c0_11] : memref<16x96xf32, #tpu.memory_space<vmem>>, vector<16x96xf32>
      %c0_12 = arith.constant 0 : index
      %c0_13 = arith.constant 0 : index
      %14 = vector.load %arg5[%c0_12, %c0_13] : memref<1x96xf32, #tpu.memory_space<vmem>>, vector<1x96xf32>
      %15 = vector.broadcast %14 : vector<1x96xf32> to vector<16x96xf32>
      %16 = arith.addf %13, %15 : vector<16x96xf32>
      %17 = arith.truncf %16 : vector<16x96xf32> to vector<16x96xbf16>
      %c0_14 = arith.constant 0 : index
      %c0_15 = arith.constant 0 : index
      %18 = vector.load %arg6[%c0_14, %c0_15] : memref<16x96xbf16, #tpu.memory_space<vmem>>, vector<16x96xbf16>
      tpu.vector_store %arg6[%c0_14, %c0_15], %17 {strides = array<i32>} : memref<16x96xbf16, #tpu.memory_space<vmem>>, vector<16x96xbf16>,
    } else {
    }
    return
  }
  func.func @transform_0(%arg0: i32, %arg1: i32, %arg2: i32) -> (i32, i32) {
    %c0_i32 = arith.constant 0 : i32
    return %arg0, %arg2 : i32, i32
  }
  func.func @transform_1(%arg0: i32, %arg1: i32, %arg2: i32) -> (i32, i32) {
    %c0_i32 = arith.constant 0 : i32
    return %arg2, %arg1 : i32, i32
  }
  func.func @transform_2(%arg0: i32, %arg1: i32, %arg2: i32) -> (i32, i32) {
    %c0_i32 = arith.constant 0 : i32
    %c0_i32_0 = arith.constant 0 : i32
    return %c0_i32, %arg1 : i32, i32
  }
  func.func @transform_3(%arg0: i32, %arg1: i32, %arg2: i32) -> (i32, i32) {
    %c0_i32 = arith.constant 0 : i32
    return %arg0, %arg1 : i32, i32
  }
}

</mosaic_0001>

<llo_original>
// kernel: tpu_custom_call.1
$region0: #{tpu_custom_call.1}
  #allocation0 [shape = 'u32[]', space=smem, size = 0x4, offset = 0x4, fixed_abs, tag = 'smem constant byte address 0x4 - core index']
  #allocation1 [shape = 'u32[72,128]{1,0:T(1,128)}', space=vmem, size = 0x9000, scoped, tag = 'internal scratch']
  #allocation2 [shape = 'f32[16,96]{1,0:T(8,128)}', space=vmem, size = 0x2000, scoped, tag = 'scratch operand']
  %s0 = inlined_call_operand.hbm [shape: f32[16,32], index: 0, kind: input, shape index: {}]
  %s1 = inlined_call_operand.hbm [shape: bf16[32,96], index: 1, kind: input, shape index: {}]
  %s2 = inlined_call_operand.vmem [shape: f32[1,96], index: 2, kind: input, shape index: {}]
  %s3 = inlined_call_operand.hbm [shape: bf16[16,96], index: 3, kind: output, shape index: {}]
  %s4 = sld [smem:[#allocation0]]
  $region38: #{tpu_custom_call.1} parent=0
    _
  %s6 = ssub.s32 1, %s4
  %s7 = scalar_select 0, %s6, %s4
  $region1: #{tpu_custom_call.1} parent=0
    #allocation3 [shape = 'u8[8192]{0}', space=vmem, size = 0x2000, scoped, tag = 'input window, operand 0, single buffered']
    #allocation4 [shape = 's32[1]{0}', space=sflag, size = 0x4, scoped, tag = 'scoped memory for tpu_custom_call.1']
    #allocation5 [shape = 's32[1]{0}', space=sflag, size = 0x4, scoped, tag = 'scoped memory for tpu_custom_call.1']
    #allocation6 [shape = 'u8[8192]{0}', space=vmem, size = 0x2000, scoped, tag = 'input window, operand 1, single buffered']
    #allocation7 [shape = 's32[1]{0}', space=sflag, size = 0x4, scoped, tag = 'scoped memory for tpu_custom_call.1']
    #allocation8 [shape = 'u8[4096]{0}', space=vmem, size = 0x1000, scoped, tag = 'output window, operand 0, single buffered']
    %8 = vsyncpa [#allocation4], 0
    %9 = vsyncpa [#allocation7], 0
    %10 = vsyncpa [#allocation5], 0
    // Predicated region
    $region2: #{tpu_custom_call.1} parent=1 // pred_check
      _
    $region3: #{tpu_custom_call.1} parent=1 // pred_check_branch
      %12 = sbr.rel (0) target = $region5
    $region4: #{tpu_custom_call.1} parent=1 // pred_region
      %14 = vsyncadd [#allocation4], 0
      %s15 = sshll.u32 %s0, 4
      %s16 = int_to_ptr.hbm [resolvable:$true] %s15
      %s17 = sshll.u32 [#allocation3], 4
      %s18 = int_to_ptr.vmem [resolvable:$true] %s17
      %23 = dma.hbm_to_vmem [thread:$0]  %s16, 256, %s18, [#allocation4], 128, 128, 8
    $region5: #{tpu_custom_call.1} parent=1 // pred_fallthru
      _
    // Predicated region
    $region6: #{tpu_custom_call.1} parent=1 // pred_check
      _
    $region7: #{tpu_custom_call.1} parent=1 // pred_check_branch
      %25 = sbr.rel (0) target = $region9
    $region8: #{tpu_custom_call.1} parent=1 // pred_region
      %27 = vsyncadd [#allocation7], 0
      %s28 = sshll.u32 %s1, 4
      %s29 = int_to_ptr.hbm [resolvable:$true] %s28
      %s30 = sshll.u32 [#allocation6], 4
      %s31 = int_to_ptr.vmem [resolvable:$true] %s30
      %36 = dma.hbm_to_vmem [thread:$0]  %s29, 256, %s31, [#allocation7], 64, 64, 4
    $region9: #{tpu_custom_call.1} parent=1 // pred_fallthru
      _
    // Predicated region
    $region10: #{tpu_custom_call.1} parent=1 // pred_check
      _
    $region11: #{tpu_custom_call.1} parent=1 // pred_check_branch
      %38 = sbr.rel (0) target = $region13
    $region12: #{tpu_custom_call.1} parent=1 // pred_region
      _
    $region13: #{tpu_custom_call.1} parent=1 // pred_fallthru
      _
    // Predicated region
    $region14: #{tpu_custom_call.1} parent=1 // pred_check
      _
    $region15: #{tpu_custom_call.1} parent=1 // pred_check_branch
      %40 = sbr.rel (0) target = $region17
    $region16: #{tpu_custom_call.1} parent=1 // pred_region
      %42 = dma.done [#allocation4], 256
    $region17: #{tpu_custom_call.1} parent=1 // pred_fallthru
      _
    // Predicated region
    $region18: #{tpu_custom_call.1} parent=1 // pred_check
      _
    $region19: #{tpu_custom_call.1} parent=1 // pred_check_branch
      %44 = sbr.rel (0) target = $region21
    $region20: #{tpu_custom_call.1} parent=1 // pred_region
      %46 = dma.done [#allocation7], 256
    $region21: #{tpu_custom_call.1} parent=1 // pred_fallthru
      _
    %p48 = scmp.eq.s32.totalorder 0, 0
    // Predicated region
    $region22: #{tpu_custom_call.1} parent=1 // pred_check
      %p49 = pneg %p48
    $region23: #{tpu_custom_call.1} parent=1 // pred_check_branch
      %51 = sbr.rel (%p49) target = $region25
    $region24: #{tpu_custom_call.1} parent=1 // pred_region
      %vm52 = vcmask 785408
      %53 = vst.msk [vmem:[#allocation2] sm:$0xff] %vm52, 0.0
      %54 = vst.msk [vmem:[#allocation2 + $0x8] sm:$0xff] %vm52, 0.0
    $region25: #{tpu_custom_call.1} parent=1 // pred_fallthru
      _
    %v55 = vld [vmem:[#allocation2] sm:$0xff]
    %v56 = vld [vmem:[#allocation2 + $0x8] sm:$0xff]
    %v57 = vld [vmem:[#allocation3] sm:$0xff]
    %v58 = vld [vmem:[#allocation3 + $0x8] sm:$0xff]
    %v59 = vpack.c.bf16 %v58, %v57
    %v60 = vld [vmem:[#allocation6] sm:$0xf]
    %v61 = vld [vmem:[#allocation6 + $0x4] sm:$0xf]
    %v62 = vld [vmem:[#allocation6 + $0x8] sm:$0xf]
    %v63 = vld [vmem:[#allocation6 + $0xc] sm:$0xf]
    %v68 = vunpack.c.l.b16 %v60
    %v69 = vunpack.c.l.b16 %v61
    %v70 = vunpack.c.l.b16 %v62
    %v71 = vunpack.c.l.b16 %v63
    %v72 = vpack.c.b16 %v69, %v68
    %v73 = vpack.c.b16 %v71, %v70
    %vm76 = vcmask 261120
    %v78 = vsel %vm76, %v59, 0
    %80 = vmatpush.bf16.msra.mxu0 0
    %81 = vmatpush.bf16.msra.mxu0 0
    %82 = vmatpush.bf16.msra.mxu0 0
    %83 = vmatpush.bf16.msra.mxu0 0
    %84 = vmatpush.bf16.msra.mxu0 0
    %85 = vmatpush.bf16.msra.mxu0 0
    %86 = vmatpush.bf16.msra.mxu0 %v73
    %87 = vmatpush.bf16.msra.mxu0 %v72
    %88 = vmatmul.bf16.gmra.mxu0 %v78
    %v89 = vpop.f32.mrf.mxu0
    %v90 = vadd.f32 0.0, %v89
    %v91 = vpop.f32.mrf.mxu0
    %v92 = vadd.f32 0.0, %v91
    %93 = vdwg.mxu0
    %v94 = vadd.f32 %v55, %v90
    %v95 = vadd.f32 %v56, %v92
    %vm96 = vcmask 785408
    %97 = vst.msk [vmem:[#allocation2] sm:$0xff] %vm96, %v94
    %98 = vst.msk [vmem:[#allocation2 + $0x8] sm:$0xff] %vm96, %v95
    // Predicated region
    $region26: #{tpu_custom_call.1} parent=1 // pred_check
      %p99 = pneg %p48
    $region27: #{tpu_custom_call.1} parent=1 // pred_check_branch
      %101 = sbr.rel (%p99) target = $region29
    $region28: #{tpu_custom_call.1} parent=1 // pred_region
      %v102 = vld [vmem:[#allocation2] sm:$0xff]
      %v103 = vld [vmem:[#allocation2 + $0x8] sm:$0xff]
      %v104 = vld [vmem:[%s2] sm:$0x1]
      %v106 = vperm.slane %v104, 0
      %v108 = vadd.f32 %v102, %v106
      %v109 = vadd.f32 %v103, %v106
      %v110 = vpack.c.bf16 %v108, %v108
      %v111 = vpack.c.bf16 %v109, %v109
      %vm112 = vcmask 781312
      %113 = vst.msk [vmem:[#allocation8] sm:$0xf] %vm112, %v110
      %114 = vst.msk [vmem:[#allocation8 + $0x4] sm:$0xf] %vm112, %v111
    $region29: #{tpu_custom_call.1} parent=1 // pred_fallthru
      _
    // Predicated region
    $region30: #{tpu_custom_call.1} parent=1 // pred_check
      _
    $region31: #{tpu_custom_call.1} parent=1 // pred_check_branch
      %116 = sbr.rel (0) target = $region33
    $region32: #{tpu_custom_call.1} parent=1 // pred_region
      %118 = vsyncadd [#allocation5], 0
      %s119 = sshll.u32 [#allocation8], 4
      %s120 = int_to_ptr.vmem [resolvable:$true] %s119
      %s121 = sshll.u32 %s3, 4
      %s122 = int_to_ptr.hbm [resolvable:$true] %s121
      %127 = dma.vmem_to_hbm [thread:$0]  %s120, 128, %s122, [#allocation5], 64, 64, 4
    $region33: #{tpu_custom_call.1} parent=1 // pred_fallthru
      _
    // Predicated region
    $region34: #{tpu_custom_call.1} parent=1 // pred_check
      _
    $region35: #{tpu_custom_call.1} parent=1 // pred_check_branch
      %129 = sbr.rel (0) target = $region37
    $region36: #{tpu_custom_call.1} parent=1 // pred_region
      %131 = dma.done [#allocation5], 128
    $region37: #{tpu_custom_call.1} parent=1 // pred_fallthru
      _
    %132 = vsyncpa [#allocation4], 1
    %133 = vsyncpa [#allocation7], 1
    %134 = vsyncpa [#allocation5], 1

</llo_original>
